<compile_context>
chip_gen: v7x
topology: tpu7x:2x2x1
jax: 0.10.0
libtpu: 0.0.40
codegen_flags: <defaults>
</compile_context>

<pallas_src>
import functools

import jax
import jax.numpy as jnp
from jax.experimental import pallas as pl
from jax.experimental.pallas import tpu as pltpu


def _critic_kernel(x_ref, w1_ref, b1_ref, w2_ref, b2_ref, w3r_ref, b3_ref,
                   o_ref, *, use_bf16):
    x = x_ref[...]
    if use_bf16:
        x = x.astype(jnp.bfloat16)  # weights already bf16 (cast once in wrapper)

    # Layer 1 (F -> H): MXU matmul, f32 accumulate; bias add on VPU.
    h1 = jnp.dot(x, w1_ref[...], preferred_element_type=jnp.float32) + b1_ref[...]
    if use_bf16:
        # bf16 tanh hits the v6e/v7x bf16 EUP path (~2x f32) and is the dtype
        # the next bf16 MXU matmul needs anyway.  (f32 path stays all-f32.)
        h1 = h1.astype(jnp.bfloat16)
    h1 = jnp.tanh(h1)

    # Layer 2 (H -> H): the only nontrivial MXU work.
    h2 = jnp.dot(h1, w2_ref[...], preferred_element_type=jnp.float32) + b2_ref[...]
    if use_bf16:
        h2 = h2.astype(jnp.bfloat16)
    h2 = jnp.tanh(h2)

    # Layer 3 (H -> 1), emitted lane-dense as a (1, TB) row:
    #   (1, H) . (TB, H)^T -> (1, TB)   (contract H on both operands)
    h3 = jax.lax.dot_general(w3r_ref[...], h2, (((1,), (1,)), ((), ())),
                             preferred_element_type=jnp.float32)
    h3 = h3 + b3_ref[...]  # b3 is (1, 1): broadcasts across lanes

    # sigmoid(z) == 0.5 * (1 + tanh(0.5 * z)): single EUP tanh, no exp/divide.
    o_ref[0] = (0.5 * (1.0 + jnp.tanh(0.5 * h3))).astype(o_ref.dtype)


def model_d_critic_forward(x, params, *, tb=2048, use_bf16=True):
    """x: (B, obs_size + act_size) float32. Returns (B, 1) float32.

    use_bf16=True is the right default on v6e/v7x; pass use_bf16=False on v5e
    (no bf16 VPU/EUP and its 4x128^2 MXU already maps the f32 contraction well).
    """
    w1, b1, w2, b2, w3, b3 = params
    B, F = x.shape
    H = w1.shape[1]

    # Final-layer weight as a (1, H) row for the lane-dense layer-3 dot.
    w3_row = w3.reshape(1, H)

    if use_bf16:
        w1 = w1.astype(jnp.bfloat16)
        w2 = w2.astype(jnp.bfloat16)
        w3_row = w3_row.astype(jnp.bfloat16)

    # Batch tile: force a multiple of 8 (sublane constraint), cap at padded B;
    # when there is enough work keep >= 2 grid steps so the "parallel" batch
    # axis can actually feed both v7x TensorCores.
    tb = max(8, (int(tb) // 8) * 8)
    b_pad8 = ((B + 7) // 8) * 8
    TB = min(tb, b_pad8)
    if b_pad8 >= 16:
        half = ((b_pad8 // 2 + 7) // 8) * 8
        TB = min(TB, half)
    B_pad = ((B + TB - 1) // TB) * TB
    if B_pad != B:
        x = jnp.pad(x, ((0, B_pad - B), (0, 0)))
    n_tiles = B_pad // TB

    kernel = functools.partial(_critic_kernel, use_bf16=use_bf16)

    cost = pl.CostEstimate(
        flops=2 * B_pad * (F * H + H * H + H),
        transcendentals=B_pad * (2 * H + 1),
        bytes_accessed=int(x.size) * x.dtype.itemsize
        + sum(int(a.size) * a.dtype.itemsize
              for a in (w1, b1, w2, b2, w3_row, b3))
        + B_pad * 4,
    )

    out = pl.pallas_call(
        kernel,
        out_shape=jax.ShapeDtypeStruct((n_tiles, 1, TB), jnp.float32),
        grid=(n_tiles,),
        in_specs=[
            pl.BlockSpec((TB, F), lambda i: (i, 0)),           # x: streamed
            pl.BlockSpec(w1.shape, lambda i: (0, 0)),          # weights/biases:
            pl.BlockSpec(b1.shape, lambda i: (0, 0)),          #   VMEM-resident
            pl.BlockSpec(w2.shape, lambda i: (0, 0)),
            pl.BlockSpec(b2.shape, lambda i: (0, 0)),
            pl.BlockSpec(w3_row.shape, lambda i: (0, 0)),
            pl.BlockSpec(b3.shape, lambda i: (0, 0)),
        ],
        # Lane-dense output: last dim = TB (full extent), unmasked stores.
        out_specs=pl.BlockSpec((1, 1, TB), lambda i: (i, 0, 0)),
        compiler_params=pltpu.CompilerParams(
            dimension_semantics=("parallel",)),                # v7x: 2 TCs
        cost_estimate=cost,
    )(x, w1, b1, w2, b2, w3_row, b3)

    # (n_tiles, 1, TB) -> (B_pad, 1), drop padded rows.
    return out.reshape(B_pad, 1)[:B]


def init_params(key, obs_size, act_size, hidden_size=128):
    """Mirrors nn.Linear default init (uniform(-1/sqrt(fan_in), +)), with
    linear3.weight *= 0.1 and linear3.bias *= 0.0 as in the module."""
    in1 = obs_size + act_size
    k = jax.random.split(key, 6)

    def linear_init(kw, kb, fan_in, fan_out):
        bound = 1.0 / jnp.sqrt(jnp.float32(fan_in))
        # Stored already transposed: (fan_in, fan_out) so kernel does x @ W.
        w = jax.random.uniform(kw, (fan_in, fan_out), jnp.float32, -bound, bound)
        b = jax.random.uniform(kb, (1, fan_out), jnp.float32, -bound, bound)
        return w, b

    w1, b1 = linear_init(k[0], k[1], in1, hidden_size)
    w2, b2 = linear_init(k[2], k[3], hidden_size, hidden_size)
    w3, b3 = linear_init(k[4], k[5], hidden_size, 1)
    w3 = w3 * 0.1
    b3 = b3 * 0.0
    return (w1, b1, w2, b2, w3, b3)


def _reference_forward(x, params):
    w1, b1, w2, b2, w3, b3 = params
    h = jnp.tanh(x @ w1 + b1)
    h = jnp.tanh(h @ w2 + b2)
    return jax.nn.sigmoid(h @ w3 + b3)


if __name__ == "__main__":
    key = jax.random.PRNGKey(0)
    obs_size, act_size, hidden_size = 6, 2, 32
    batch = 8

    pkey, xkey = jax.random.split(key)
    params = init_params(pkey, obs_size, act_size, hidden_size)
    x = jax.random.normal(xkey, (batch, obs_size + act_size), jnp.float32)

    # f32 path (exact vs reference), single small tile.
    out = jax.block_until_ready(model_d_critic_forward(x, params, use_bf16=False))
    ref = _reference_forward(x, params)
    assert out.shape == (batch, 1)
    assert jnp.allclose(out, ref, atol=1e-5, rtol=1e-5)

    # Multi-tile grid + batch padding + lane-dense output path (B not a
    # multiple of the tile).
    xkey2 = jax.random.fold_in(xkey, 1)
    x2 = jax.random.normal(xkey2, (200, obs_size + act_size), jnp.float32)
    out2 = jax.block_until_ready(
        model_d_critic_forward(x2, params, tb=64, use_bf16=False))
    ref2 = _reference_forward(x2, params)
    assert out2.shape == (200, 1)
    assert jnp.allclose(out2, ref2, atol=1e-5, rtol=1e-5)

    # Default path: bf16 MXU + bf16 hidden tanh (v6e/v7x), looser tolerance.
    out3 = jax.block_until_ready(model_d_critic_forward(x2, params))
    assert out3.shape == (200, 1)
    assert jnp.allclose(out3, ref2, atol=3e-2, rtol=3e-2)

    print("KERNEL_OK")
</pallas_src>

<mosaic_0001>
module attributes {stable_mosaic.version = 11 : i64} {
  func.func @_critic_kernel(%arg0: i32, %arg1: memref<8x8xf32, #tpu.memory_space<vmem>>, %arg2: memref<8x32xf32, #tpu.memory_space<vmem>>, %arg3: memref<1x32xf32, #tpu.memory_space<vmem>>, %arg4: memref<32x32xf32, #tpu.memory_space<vmem>>, %arg5: memref<1x32xf32, #tpu.memory_space<vmem>>, %arg6: memref<1x32xf32, #tpu.memory_space<vmem>>, %arg7: memref<1x1xf32, #tpu.memory_space<vmem>>, %arg8: memref<1x1x8xf32, #tpu.memory_space<vmem>>) attributes {dimension_semantics = [#tpu.dimension_semantics<parallel>], iteration_bounds = array<i64: 1>, scalar_prefetch = 0 : i64, scratch_operands = 0 : i64, tpu.core_type = #tpu.core_type<tc>, window_params = [{transform_indices = @transform_0, window_bounds = array<i64: 8, 8>}, {pipeline_mode = #tpu.pipeline_mode<synchronous>, transform_indices = @transform_1, window_bounds = array<i64: 8, 32>}, {pipeline_mode = #tpu.pipeline_mode<synchronous>, transform_indices = @transform_2, window_bounds = array<i64: 1, 32>}, {pipeline_mode = #tpu.pipeline_mode<synchronous>, transform_indices = @transform_3, window_bounds = array<i64: 32, 32>}, {pipeline_mode = #tpu.pipeline_mode<synchronous>, transform_indices = @transform_4, window_bounds = array<i64: 1, 32>}, {pipeline_mode = #tpu.pipeline_mode<synchronous>, transform_indices = @transform_5, window_bounds = array<i64: 1, 32>}, {pipeline_mode = #tpu.pipeline_mode<synchronous>, transform_indices = @transform_6, window_bounds = array<i64: 1, 1>}, {transform_indices = @transform_7, window_bounds = array<i64: 1, 1, 8>}]} {
    %c0 = arith.constant 0 : index
    %c0_0 = arith.constant 0 : index
    %0 = vector.load %arg1[%c0, %c0_0] : memref<8x8xf32, #tpu.memory_space<vmem>>, vector<8x8xf32>
    %c0_1 = arith.constant 0 : index
    %c0_2 = arith.constant 0 : index
    %1 = vector.load %arg2[%c0_1, %c0_2] : memref<8x32xf32, #tpu.memory_space<vmem>>, vector<8x32xf32>
    %cst = arith.constant dense<0.000000e+00> : vector<8x32xf32>
    %2 = tpu.matmul %0, %1, %cst {dimension_numbers = #tpu.dot_dimension_numbers<[1], [0], [0], [1], [0, 0, 1, 1], [], []>} : vector<8x8xf32>, vector<8x32xf32>, vector<8x32xf32> -> vector<8x32xf32>
    %c0_3 = arith.constant 0 : index
    %c0_4 = arith.constant 0 : index
    %3 = vector.load %arg3[%c0_3, %c0_4] : memref<1x32xf32, #tpu.memory_space<vmem>>, vector<1x32xf32>
    %4 = vector.broadcast %3 : vector<1x32xf32> to vector<8x32xf32>
    %5 = arith.addf %2, %4 : vector<8x32xf32>
    %6 = math.tanh %5 : vector<8x32xf32>
    %c0_5 = arith.constant 0 : index
    %c0_6 = arith.constant 0 : index
    %7 = vector.load %arg4[%c0_5, %c0_6] : memref<32x32xf32, #tpu.memory_space<vmem>>, vector<32x32xf32>
    %cst_7 = arith.constant dense<0.000000e+00> : vector<8x32xf32>
    %8 = tpu.matmul %6, %7, %cst_7 {dimension_numbers = #tpu.dot_dimension_numbers<[1], [0], [0], [1], [0, 0, 1, 1], [], []>} : vector<8x32xf32>, vector<32x32xf32>, vector<8x32xf32> -> vector<8x32xf32>
    %c0_8 = arith.constant 0 : index
    %c0_9 = arith.constant 0 : index
    %9 = vector.load %arg5[%c0_8, %c0_9] : memref<1x32xf32, #tpu.memory_space<vmem>>, vector<1x32xf32>
    %10 = vector.broadcast %9 : vector<1x32xf32> to vector<8x32xf32>
    %11 = arith.addf %8, %10 : vector<8x32xf32>
    %12 = math.tanh %11 : vector<8x32xf32>
    %c0_10 = arith.constant 0 : index
    %c0_11 = arith.constant 0 : index
    %13 = vector.load %arg6[%c0_10, %c0_11] : memref<1x32xf32, #tpu.memory_space<vmem>>, vector<1x32xf32>
    %cst_12 = arith.constant dense<0.000000e+00> : vector<1x8xf32>
    %14 = tpu.matmul %13, %12, %cst_12 {dimension_numbers = #tpu.dot_dimension_numbers<[1], [1], [0], [0], [0, 0, 1, 0], [], []>} : vector<1x32xf32>, vector<8x32xf32>, vector<1x8xf32> -> vector<1x8xf32>
    %c0_13 = arith.constant 0 : index
    %c0_14 = arith.constant 0 : index
    %15 = vector.load %arg7[%c0_13, %c0_14] : memref<1x1xf32, #tpu.memory_space<vmem>>, vector<1x1xf32>
    %16 = vector.broadcast %15 : vector<1x1xf32> to vector<1x8xf32>
    %17 = arith.addf %14, %16 : vector<1x8xf32>
    %cst_15 = arith.constant 5.000000e-01 : f32
    %18 = vector.broadcast %cst_15 : f32 to vector<1x8xf32>
    %19 = arith.mulf %18, %17 : vector<1x8xf32>
    %20 = math.tanh %19 : vector<1x8xf32>
    %cst_16 = arith.constant 1.000000e+00 : f32
    %21 = vector.broadcast %cst_16 : f32 to vector<1x8xf32>
    %22 = arith.addf %21, %20 : vector<1x8xf32>
    %cst_17 = arith.constant 5.000000e-01 : f32
    %23 = vector.broadcast %cst_17 : f32 to vector<1x8xf32>
    %24 = arith.mulf %23, %22 : vector<1x8xf32>
    %c0_18 = arith.constant 0 : index
    %c0_19 = arith.constant 0 : index
    %c0_20 = arith.constant 0 : index
    %25 = vector.load %arg8[%c0_18, %c0_19, %c0_20] : memref<1x1x8xf32, #tpu.memory_space<vmem>>, vector<1x1x8xf32>
    %26 = vector.shape_cast %25 : vector<1x1x8xf32> to vector<1x8xf32>
    %27 = vector.shape_cast %24 : vector<1x8xf32> to vector<1x1x8xf32>
    tpu.vector_store %arg8[%c0_18, %c0_19, %c0_20], %27 {strides = array<i32>} : memref<1x1x8xf32, #tpu.memory_space<vmem>>, vector<1x1x8xf32>,
    return
  }
  func.func @transform_0(%arg0: i32) -> (i32, i32) {
    %c0_i32 = arith.constant 0 : i32
    %c0_i32_0 = arith.constant 0 : i32
    return %arg0, %c0_i32 : i32, i32
  }
  func.func @transform_1(%arg0: i32) -> (i32, i32) {
    %c0_i32 = arith.constant 0 : i32
    %c0_i32_0 = arith.constant 0 : i32
    %c0_i32_1 = arith.constant 0 : i32
    return %c0_i32, %c0_i32_0 : i32, i32
  }
  func.func @transform_2(%arg0: i32) -> (i32, i32) {
    %c0_i32 = arith.constant 0 : i32
    %c0_i32_0 = arith.constant 0 : i32
    %c0_i32_1 = arith.constant 0 : i32
    return %c0_i32, %c0_i32_0 : i32, i32
  }
  func.func @transform_3(%arg0: i32) -> (i32, i32) {
    %c0_i32 = arith.constant 0 : i32
    %c0_i32_0 = arith.constant 0 : i32
    %c0_i32_1 = arith.constant 0 : i32
    return %c0_i32, %c0_i32_0 : i32, i32
  }
  func.func @transform_4(%arg0: i32) -> (i32, i32) {
    %c0_i32 = arith.constant 0 : i32
    %c0_i32_0 = arith.constant 0 : i32
    %c0_i32_1 = arith.constant 0 : i32
    return %c0_i32, %c0_i32_0 : i32, i32
  }
  func.func @transform_5(%arg0: i32) -> (i32, i32) {
    %c0_i32 = arith.constant 0 : i32
    %c0_i32_0 = arith.constant 0 : i32
    %c0_i32_1 = arith.constant 0 : i32
    return %c0_i32, %c0_i32_0 : i32, i32
  }
  func.func @transform_6(%arg0: i32) -> (i32, i32) {
    %c0_i32 = arith.constant 0 : i32
    %c0_i32_0 = arith.constant 0 : i32
    %c0_i32_1 = arith.constant 0 : i32
    return %c0_i32, %c0_i32_0 : i32, i32
  }
  func.func @transform_7(%arg0: i32) -> (i32, i32, i32) {
    %c0_i32 = arith.constant 0 : i32
    %c0_i32_0 = arith.constant 0 : i32
    %c0_i32_1 = arith.constant 0 : i32
    return %arg0, %c0_i32, %c0_i32_0 : i32, i32, i32
  }
}

</mosaic_0001>

<llo_original>
// kernel: tpu_custom_call.1
$region0: #{tpu_custom_call.1}
  #allocation0 [shape = 'u32[]', space=smem, size = 0x4, offset = 0x4, fixed_abs, tag = 'smem constant byte address 0x4 - core index']
  #allocation1 [shape = 'u32[144,128]{1,0:T(1,128)}', space=vmem, size = 0x12000, scoped, tag = 'internal scratch']
  #allocation2 [shape = 'f32[1,1]{1,0:T(1,128)S(1)}', space=vmem, size = 0x200, scoped, tag = 'scoped memory for tpu_custom_call.1']
  %s0 = inlined_call_operand.hbm [shape: f32[8,8], index: 0, kind: input, shape index: {}]
  %s1 = inlined_call_operand.hbm [shape: f32[8,32], index: 1, kind: input, shape index: {}]
  %s2 = inlined_call_operand.vmem [shape: f32[1,32], index: 2, kind: input, shape index: {}]
  %s3 = inlined_call_operand.hbm [shape: f32[32,32], index: 3, kind: input, shape index: {}]
  %s4 = inlined_call_operand.vmem [shape: f32[1,32], index: 4, kind: input, shape index: {}]
  %s5 = inlined_call_operand.vmem [shape: f32[1,32], index: 5, kind: input, shape index: {}]
  %s6 = inlined_call_operand.<no memory space> [shape: f32[1,1], index: 6, kind: input, shape index: {}]
  %s7 = inlined_call_operand.hbm [shape: f32[1,1,8], index: 7, kind: output, shape index: {}]
  %s8 = sld [smem:[#allocation0]]
  $region50: #{tpu_custom_call.1} parent=0
    _
  %s10 = ssub.s32 1, %s8
  %s11 = scalar_select 0, %s10, %s8
  %v12 = vstv %s6
  %13 = vst [vmem:[#allocation2] sm:$0x1] %v12
  $region1: #{tpu_custom_call.1} parent=0
    #allocation3 [shape = 'u8[4096]{0}', space=vmem, size = 0x1000, scoped, tag = 'input window, operand 0, single buffered']
    #allocation4 [shape = 's32[1]{0}', space=sflag, size = 0x4, scoped, tag = 'scoped memory for tpu_custom_call.1']
    #allocation5 [shape = 's32[1]{0}', space=sflag, size = 0x4, scoped, tag = 'scoped memory for tpu_custom_call.1']
    #allocation6 [shape = 'u8[4096]{0}', space=vmem, size = 0x1000, scoped, tag = 'input window, operand 1, single buffered']
    #allocation7 [shape = 's32[1]{0}', space=sflag, size = 0x4, scoped, tag = 'scoped memory for tpu_custom_call.1']
    #allocation8 [shape = 'u8[16384]{0}', space=vmem, size = 0x4000, scoped, tag = 'input window, operand 3, single buffered']
    #allocation9 [shape = 'u8[512]{0}', space=vmem, size = 0x400, scoped, tag = 'output window, operand 0, single buffered']
    %14 = vsyncpa [#allocation4], 0
    %15 = vsyncpa [#allocation7], 0
    %16 = vsyncpa [#allocation5], 0
    // Predicated region
    $region2: #{tpu_custom_call.1} parent=1 // pred_check
      _
    $region3: #{tpu_custom_call.1} parent=1 // pred_check_branch
      %18 = sbr.rel (0) target = $region5
    $region4: #{tpu_custom_call.1} parent=1 // pred_region
      %s20 = ssub.s32 128, 128
      %21 = vsyncadd [#allocation4], %s20
      %s23 = sshll.u32 [#allocation3], 4
      %s24 = int_to_ptr.vmem [resolvable:$true] %s23
      %26 = dma.hbm_to_vmem [thread:$0]  %s0, 128, %s24, [#allocation4]
    $region5: #{tpu_custom_call.1} parent=1 // pred_fallthru
      _
    // Predicated region
    $region6: #{tpu_custom_call.1} parent=1 // pred_check
      _
    $region7: #{tpu_custom_call.1} parent=1 // pred_check_branch
      %28 = sbr.rel (0) target = $region9
    $region8: #{tpu_custom_call.1} parent=1 // pred_region
      %s30 = ssub.s32 128, 128
      %31 = vsyncadd [#allocation7], %s30
      %s33 = sshll.u32 [#allocation6], 4
      %s34 = int_to_ptr.vmem [resolvable:$true] %s33
      %36 = dma.hbm_to_vmem [thread:$0]  %s1, 128, %s34, [#allocation7]
    $region9: #{tpu_custom_call.1} parent=1 // pred_fallthru
      _
    // Predicated region
    $region10: #{tpu_custom_call.1} parent=1 // pred_check
      _
    $region11: #{tpu_custom_call.1} parent=1 // pred_check_branch
      %38 = sbr.rel (0) target = $region13
    $region12: #{tpu_custom_call.1} parent=1 // pred_region
      _
    $region13: #{tpu_custom_call.1} parent=1 // pred_fallthru
      _
    // Predicated region
    $region14: #{tpu_custom_call.1} parent=1 // pred_check
      _
    $region15: #{tpu_custom_call.1} parent=1 // pred_check_branch
      %40 = sbr.rel (0) target = $region17
    $region16: #{tpu_custom_call.1} parent=1 // pred_region
      %s42 = ssub.s32 512, 512
      %43 = vsyncadd [#allocation7], %s42
      %s44 = sshll.u32 [#allocation8], 4
      %s45 = int_to_ptr.vmem [resolvable:$true] %s44
      %50 = dma.hbm_to_vmem [thread:$0]  %s3, 512, %s45, [#allocation7], 128, 128, 8
    $region17: #{tpu_custom_call.1} parent=1 // pred_fallthru
      _
    // Predicated region
    $region18: #{tpu_custom_call.1} parent=1 // pred_check
      _
    $region19: #{tpu_custom_call.1} parent=1 // pred_check_branch
      %52 = sbr.rel (0) target = $region21
    $region20: #{tpu_custom_call.1} parent=1 // pred_region
      _
    $region21: #{tpu_custom_call.1} parent=1 // pred_fallthru
      _
    // Predicated region
    $region22: #{tpu_custom_call.1} parent=1 // pred_check
      _
    $region23: #{tpu_custom_call.1} parent=1 // pred_check_branch
      %54 = sbr.rel (0) target = $region25
    $region24: #{tpu_custom_call.1} parent=1 // pred_region
      _
    $region25: #{tpu_custom_call.1} parent=1 // pred_fallthru
      _
    // Predicated region
    $region26: #{tpu_custom_call.1} parent=1 // pred_check
      _
    $region27: #{tpu_custom_call.1} parent=1 // pred_check_branch
      %56 = sbr.rel (0) target = $region29
    $region28: #{tpu_custom_call.1} parent=1 // pred_region
      _
    $region29: #{tpu_custom_call.1} parent=1 // pred_fallthru
      _
    // Predicated region
    $region30: #{tpu_custom_call.1} parent=1 // pred_check
      _
    $region31: #{tpu_custom_call.1} parent=1 // pred_check_branch
      %58 = sbr.rel (0) target = $region33
    $region32: #{tpu_custom_call.1} parent=1 // pred_region
      %59 = dma.done [#allocation4], 128
    $region33: #{tpu_custom_call.1} parent=1 // pred_fallthru
      _
    // Predicated region
    $region34: #{tpu_custom_call.1} parent=1 // pred_check
      _
    $region35: #{tpu_custom_call.1} parent=1 // pred_check_branch
      %61 = sbr.rel (0) target = $region37
    $region36: #{tpu_custom_call.1} parent=1 // pred_region
      %62 = dma.done [#allocation7], 128
    $region37: #{tpu_custom_call.1} parent=1 // pred_fallthru
      _
    // Predicated region
    $region38: #{tpu_custom_call.1} parent=1 // pred_check
      _
    $region39: #{tpu_custom_call.1} parent=1 // pred_check_branch
      %64 = sbr.rel (0) target = $region41
    $region40: #{tpu_custom_call.1} parent=1 // pred_region
      %65 = dma.done [#allocation7], 512
    $region41: #{tpu_custom_call.1} parent=1 // pred_fallthru
      _
    %v66 = vld [vmem:[#allocation3] sm:$0xff]
    %v67 = vld [vmem:[#allocation6] sm:$0xff]
    %v68 = vld [vmem:[%s2] sm:$0x1]
    %v70 = vlaneseq
    %v71 = vshrl.u32 %v70, 7
    %v72 = vsub.s32 0, %v71
    %v73 = vrot.slane %v68, %v72
    %vm75 = vcmask 64512
    %v77 = vsel %vm75, %v66, 0
    %79 = vmatprep.subr.mxu0 0.0
    %80 = vmatpush1.msra.mxu0 %v67
    %81 = vmatprep.subr.mxu0 0.0
    %82 = vmatpush1.msra.mxu0 0.0
    %83 = vmatprep.subr.mxu0 0.0
    %84 = vmatpush1.msra.mxu0 0.0
    %85 = vmatprep.subr.mxu0 0.0
    %86 = vmatpush1.msra.mxu0 0.0
    %87 = vmatprep.subr.mxu0 0.0
    %88 = vmatpush1.msra.mxu0 0.0
    %89 = vmatprep.subr.mxu0 0.0
    %90 = vmatpush1.msra.mxu0 0.0
    %91 = vmatprep.subr.mxu0 0.0
    %92 = vmatpush1.msra.mxu0 0.0
    %93 = vmatprep.subr.mxu0 0.0
    %94 = vmatpush1.msra.mxu0 0.0
    %95 = vmatprep.subr.mxu0 0.0
    %96 = vmatpush1.msra.mxu0 0.0
    %97 = vmatprep.subr.mxu0 0.0
    %98 = vmatpush1.msra.mxu0 0.0
    %99 = vmatprep.subr.mxu0 0.0
    %100 = vmatpush1.msra.mxu0 0.0
    %101 = vmatprep.subr.mxu0 0.0
    %102 = vmatpush1.msra.mxu0 0.0
    %103 = vmatprep.subr.mxu0 0.0
    %104 = vmatpush1.msra.mxu0 0.0
    %105 = vmatprep.subr.mxu0 0.0
    %106 = vmatpush1.msra.mxu0 0.0
    %107 = vmatprep.subr.mxu0 0.0
    %108 = vmatpush1.msra.mxu0 0.0
    %109 = vmatprep.subr.mxu0 0.0
    %110 = vmatpush1.msra.mxu0 0.0
    %111 = vmatprep.subr.mxu0 0.0
    %112 = vmatpush1.msra.mxu0 0.0
    %113 = vmatprep.subr.mxu0 0.0
    %114 = vmatpush1.msra.mxu0 0.0
    %115 = vmatprep.subr.mxu0 0.0
    %116 = vmatpush1.msra.mxu0 0.0
    %117 = vmatprep.subr.mxu0 0.0
    %118 = vmatpush1.msra.mxu0 0.0
    %119 = vmatprep.subr.mxu0 0.0
    %120 = vmatpush1.msra.mxu0 0.0
    %121 = vmatprep.subr.mxu0 0.0
    %122 = vmatpush1.msra.mxu0 0.0
    %123 = vmatprep.subr.mxu0 0.0
    %124 = vmatpush1.msra.mxu0 0.0
    %125 = vmatprep.subr.mxu0 0.0
    %126 = vmatpush1.msra.mxu0 0.0
    %127 = vmatprep.subr.mxu0 0.0
    %128 = vmatpush1.msra.mxu0 0.0
    %129 = vmatprep.subr.mxu0 0.0
    %130 = vmatpush1.msra.mxu0 0.0
    %131 = vmatprep.subr.mxu0 0.0
    %132 = vmatpush1.msra.mxu0 0.0
    %133 = vmatprep.subr.mxu0 0.0
    %134 = vmatpush1.msra.mxu0 0.0
    %135 = vmatprep.subr.mxu0 0.0
    %136 = vmatpush1.msra.mxu0 0.0
    %137 = vmatprep.subr.mxu0 0.0
    %138 = vmatpush1.msra.mxu0 0.0
    %139 = vmatprep.subr.mxu0 0.0
    %140 = vmatpush1.msra.mxu0 0.0
    %141 = vmatprep.subr.mxu0 0.0
    %142 = vmatpush1.msra.mxu0 0.0
    %143 = vmatprep.mubr.f32.mxu0 0.0
    %144 = vmatmul.mubr.f32.gmra.mrb[0].mxu0 %v77
    %v145 = vpop.f32.mrb[0].mxu0
    %v146 = vadd.f32 %v73, %v145
    %v147 = vpop.f32.mrb[0].mxu0
    %148 = vdwg.mxu0
    %v149 = vtanh.pop %v146
    %v150 = vld [vmem:[#allocation8] sm:$0xff]
    %v151 = vld [vmem:[#allocation8 + $0x8] sm:$0xff]
    %v152 = vld [vmem:[#allocation8 + $0x10] sm:$0xff]
    %v153 = vld [vmem:[#allocation8 + $0x18] sm:$0xff]
    %v154 = vld [vmem:[%s4] sm:$0x1]
    %v156 = vlaneseq
    %v157 = vshrl.u32 %v156, 7
    %v158 = vsub.s32 0, %v157
    %v159 = vrot.slane %v154, %v158
    %vm161 = vcmask 261120
    %v163 = vsel %vm161, %v149, 0
    %165 = vmatprep.subr.mxu0 0.0
    %166 = vmatpush1.msra.mxu0 %v150
    %167 = vmatprep.subr.mxu0 0.0
    %168 = vmatpush1.msra.mxu0 %v151
    %169 = vmatprep.subr.mxu0 0.0
    %170 = vmatpush1.msra.mxu0 %v152
    %171 = vmatprep.subr.mxu0 0.0
    %172 = vmatpush1.msra.mxu0 %v153
    %173 = vmatprep.subr.mxu0 0.0
    %174 = vmatpush1.msra.mxu0 0.0
    %175 = vmatprep.subr.mxu0 0.0
    %176 = vmatpush1.msra.mxu0 0.0
    %177 = vmatprep.subr.mxu0 0.0
    %178 = vmatpush1.msra.mxu0 0.0
    %179 = vmatprep.subr.mxu0 0.0
    %180 = vmatpush1.msra.mxu0 0.0
    %181 = vmatprep.subr.mxu0 0.0
    %182 = vmatpush1.msra.mxu0 0.0
    %183 = vmatprep.subr.mxu0 0.0
    %184 = vmatpush1.msra.mxu0 0.0
    %185 = vmatprep.subr.mxu0 0.0
    %186 = vmatpush1.msra.mxu0 0.0
    %187 = vmatprep.subr.mxu0 0.0
    %188 = vmatpush1.msra.mxu0 0.0
    %189 = vmatprep.subr.mxu0 0.0
    %190 = vmatpush1.msra.mxu0 0.0
    %191 = vmatprep.subr.mxu0 0.0
    %192 = vmatpush1.msra.mxu0 0.0
    %193 = vmatprep.subr.mxu0 0.0
    %194 = vmatpush1.msra.mxu0 0.0
    %195 = vmatprep.subr.mxu0 0.0
    %196 = vmatpush1.msra.mxu0 0.0
    %197 = vmatprep.subr.mxu0 0.0
    %198 = vmatpush1.msra.mxu0 0.0
    %199 = vmatprep.subr.mxu0 0.0
    %200 = vmatpush1.msra.mxu0 0.0
    %201 = vmatprep.subr.mxu0 0.0
    %202 = vmatpush1.msra.mxu0 0.0
    %203 = vmatprep.subr.mxu0 0.0
    %204 = vmatpush1.msra.mxu0 0.0
    %205 = vmatprep.subr.mxu0 0.0
    %206 = vmatpush1.msra.mxu0 0.0
    %207 = vmatprep.subr.mxu0 0.0
    %208 = vmatpush1.msra.mxu0 0.0
    %209 = vmatprep.subr.mxu0 0.0
    %210 = vmatpush1.msra.mxu0 0.0
    %211 = vmatprep.subr.mxu0 0.0
    %212 = vmatpush1.msra.mxu0 0.0
    %213 = vmatprep.subr.mxu0 0.0
    %214 = vmatpush1.msra.mxu0 0.0
    %215 = vmatprep.subr.mxu0 0.0
    %216 = vmatpush1.msra.mxu0 0.0
    %217 = vmatprep.subr.mxu0 0.0
    %218 = vmatpush1.msra.mxu0 0.0
    %219 = vmatprep.subr.mxu0 0.0
    %220 = vmatpush1.msra.mxu0 0.0
    %221 = vmatprep.subr.mxu0 0.0
    %222 = vmatpush1.msra.mxu0 0.0
    %223 = vmatprep.subr.mxu0 0.0
    %224 = vmatpush1.msra.mxu0 0.0
    %225 = vmatprep.subr.mxu0 0.0
    %226 = vmatpush1.msra.mxu0 0.0
    %227 = vmatprep.subr.mxu0 0.0
    %228 = vmatpush1.msra.mxu0 0.0
    %229 = vmatprep.mubr.f32.mxu0 0.0
    %230 = vmatmul.mubr.f32.gmra.mrb[0].mxu0 %v163
    %v231 = vpop.f32.mrb[0].mxu0
    %v232 = vadd.f32 %v159, %v231
    %v233 = vpop.f32.mrb[0].mxu0
    %234 = vdwg.mxu0
    %v235 = vtanh.pop %v232
    %v236 = vld [vmem:[%s5] sm:$0x1]
    %v237 = vld [vmem:[#allocation2] sm:$0x1]
    %239 = vset.pattern.permute.xlu0 0
    %240 = vperm.xlu0 %239, %v237
    %v241 = vpop.permute.xlu0 %240
    %v243 = vlaneseq
    %v244 = vshrl.u32 %v243, 7
    %v245 = vsub.s32 0, %v244
    %v246 = vrot.slane %v241, %v245
    %v248 = vsel %vm161, %v236, 0
    %v251 = vsel %vm161, %v235, 0
    %253 = vmatprep.subr.mxu0 0.0
    %254 = vmatpush1.xpose.msra.mxu0 %v251
    %255 = vmatprep.subr.mxu0 0.0
    %256 = vmatpush1.xpose.msra.mxu0 0.0
    %257 = vmatprep.subr.mxu0 0.0
    %258 = vmatpush1.xpose.msra.mxu0 0.0
    %259 = vmatprep.subr.mxu0 0.0
    %260 = vmatpush1.xpose.msra.mxu0 0.0
    %261 = vmatprep.subr.mxu0 0.0
    %262 = vmatpush1.xpose.msra.mxu0 0.0
    %263 = vmatprep.subr.mxu0 0.0
    %264 = vmatpush1.xpose.msra.mxu0 0.0
    %265 = vmatprep.subr.mxu0 0.0
    %266 = vmatpush1.xpose.msra.mxu0 0.0
    %267 = vmatprep.subr.mxu0 0.0
    %268 = vmatpush1.xpose.msra.mxu0 0.0
    %269 = vmatprep.subr.mxu0 0.0
    %270 = vmatpush1.xpose.msra.mxu0 0.0
    %271 = vmatprep.subr.mxu0 0.0
    %272 = vmatpush1.xpose.msra.mxu0 0.0
    %273 = vmatprep.subr.mxu0 0.0
    %274 = vmatpush1.xpose.msra.mxu0 0.0
    %275 = vmatprep.subr.mxu0 0.0
    %276 = vmatpush1.xpose.msra.mxu0 0.0
    %277 = vmatprep.subr.mxu0 0.0
    %278 = vmatpush1.xpose.msra.mxu0 0.0
    %279 = vmatprep.subr.mxu0 0.0
    %280 = vmatpush1.xpose.msra.mxu0 0.0
    %281 = vmatprep.subr.mxu0 0.0
    %282 = vmatpush1.xpose.msra.mxu0 0.0
    %283 = vmatprep.subr.mxu0 0.0
    %284 = vmatpush1.xpose.msra.mxu0 0.0
    %285 = vmatprep.subr.mxu0 0.0
    %286 = vmatpush1.xpose.msra.mxu0 0.0
    %287 = vmatprep.subr.mxu0 0.0
    %288 = vmatpush1.xpose.msra.mxu0 0.0
    %289 = vmatprep.subr.mxu0 0.0
    %290 = vmatpush1.xpose.msra.mxu0 0.0
    %291 = vmatprep.subr.mxu0 0.0
    %292 = vmatpush1.xpose.msra.mxu0 0.0
    %293 = vmatprep.subr.mxu0 0.0
    %294 = vmatpush1.xpose.msra.mxu0 0.0
    %295 = vmatprep.subr.mxu0 0.0
    %296 = vmatpush1.xpose.msra.mxu0 0.0
    %297 = vmatprep.subr.mxu0 0.0
    %298 = vmatpush1.xpose.msra.mxu0 0.0
    %299 = vmatprep.subr.mxu0 0.0
    %300 = vmatpush1.xpose.msra.mxu0 0.0
    %301 = vmatprep.subr.mxu0 0.0
    %302 = vmatpush1.xpose.msra.mxu0 0.0
    %303 = vmatprep.subr.mxu0 0.0
    %304 = vmatpush1.xpose.msra.mxu0 0.0
    %305 = vmatprep.subr.mxu0 0.0
    %306 = vmatpush1.xpose.msra.mxu0 0.0
    %307 = vmatprep.subr.mxu0 0.0
    %308 = vmatpush1.xpose.msra.mxu0 0.0
    %309 = vmatprep.subr.mxu0 0.0
    %310 = vmatpush1.xpose.msra.mxu0 0.0
    %311 = vmatprep.subr.mxu0 0.0
    %312 = vmatpush1.xpose.msra.mxu0 0.0
    %313 = vmatprep.subr.mxu0 0.0
    %314 = vmatpush1.xpose.msra.mxu0 0.0
    %315 = vmatprep.subr.mxu0 0.0
    %316 = vmatpush1.xpose.msra.mxu0 0.0
    %317 = vmatprep.mubr.f32.mxu0 0.0
    %318 = vmatmul.mubr.f32.gmra.mrb[0].mxu0 %v248
    %v319 = vpop.f32.mrb[0].mxu0
    %v320 = vadd.f32 %v246, %v319
    %v321 = vpop.f32.mrb[0].mxu0
    %322 = vdwg.mxu0
    %v323 = vmul.f32 %v320, 0.5
    %v324 = vtanh.pop %v323
    %v325 = vadd.f32 %v324, 1.0
    %v326 = vmul.f32 %v325, 0.5
    %vm327 = vcmask 57344
    %328 = vst.msk [vmem:[#allocation9] sm:$0x1] %vm327, %v326
    // Predicated region
    $region42: #{tpu_custom_call.1} parent=1 // pred_check
      _
    $region43: #{tpu_custom_call.1} parent=1 // pred_check_branch
      %330 = sbr.rel (0) target = $region45
    $region44: #{tpu_custom_call.1} parent=1 // pred_region
      %s332 = ssub.s32 16, 16
      %333 = vsyncadd [#allocation5], %s332
      %s335 = sshll.u32 [#allocation9], 4
      %s336 = int_to_ptr.vmem [resolvable:$true] %s335
      %338 = dma.vmem_to_hbm [thread:$0]  %s336, 16, %s7, [#allocation5]
    $region45: #{tpu_custom_call.1} parent=1 // pred_fallthru
      _
    // Predicated region
    $region46: #{tpu_custom_call.1} parent=1 // pred_check
      _
    $region47: #{tpu_custom_call.1} parent=1 // pred_check_branch
      %340 = sbr.rel (0) target = $region49
    $region48: #{tpu_custom_call.1} parent=1 // pred_region
      %341 = dma.done [#allocation5], 16
    $region49: #{tpu_custom_call.1} parent=1 // pred_fallthru
      _
    %342 = vsyncpa [#allocation4], 1
    %343 = vsyncpa [#allocation7], 1
    %344 = vsyncpa [#allocation5], 1

</llo_original>
